<compile_context>
chip_gen: v6e
topology: v6e:2x2x1
jax: 0.10.0
libtpu: 0.0.40
codegen_flags: <defaults>
</compile_context>

<pallas_src>
from functools import partial

import jax
import jax.numpy as jnp
from jax.experimental import pallas as pl
from jax.experimental.pallas import tpu as pltpu


# ---------------- Pallas kernel (backward hot path) ----------------
# alpha is a static Python float (custom_vjp nondiff arg), so -alpha is baked
# into the kernel as a compile-time constant: no SMEM scalar input, no
# per-tile negate/broadcast, plain GridSpec.

def _neg_scale_kernel(g_ref, o_ref, *, neg_alpha):
    g = g_ref[...]
    # Scale in f32 so a bf16 grad doesn't lose alpha precision, then cast
    # back to the grad dtype (the casts are no-ops for f32 grads).
    o_ref[...] = (g.astype(jnp.float32) * neg_alpha).astype(o_ref.dtype)


def _run_neg_scale(g, alpha):
    """Compute -alpha * g via a lane-dense streaming Pallas kernel."""
    orig_shape, orig_dtype = g.shape, g.dtype
    flat = g.reshape(-1)
    n = flat.shape[0]

    # Pick the widest lane-dense last dim that divides n exactly (wide
    # unmasked vst stores, long contiguous DMA bursts).  Only pad when the
    # element count is not a multiple of 128.
    lane = None
    for cand in (1024, 512, 256, 128):
        if n % cand == 0:
            lane = cand
            break
    padded = False
    if lane is None:
        lane = 128
        pad = (-n) % lane
        flat = jnp.pad(flat, (0, pad))
        padded = True

    rows = flat.shape[0] // lane
    g2d = flat.reshape(rows, lane)          # contiguous reshape: free

    # Block sizing: cap at ~2 MiB per block.  Double-buffered footprint is
    # 2 refs x 2 buffers x 2 MiB = 8 MiB, under v5e's 16 MiB default scoped
    # VMEM and well under v6e/v7x's 32 MiB scoped limit, while being large
    # enough to amortize the ~0.35 us/grid-step overhead.
    bytes_per_row = lane * g2d.dtype.itemsize
    max_block_bytes = 2 * 1024 * 1024
    tr_cap = max(8, max_block_bytes // bytes_per_row)
    tr_cap = (tr_cap // 8) * 8              # sublane-aligned tile rows
    tr = rows if rows <= tr_cap else tr_cap

    grid = (pl.cdiv(rows, tr),)
    y2d = pl.pallas_call(
        partial(_neg_scale_kernel, neg_alpha=-float(alpha)),
        out_shape=jax.ShapeDtypeStruct((rows, lane), g2d.dtype),
        grid_spec=pl.GridSpec(
            grid=grid,
            in_specs=[pl.BlockSpec((tr, lane), lambda i: (i, 0))],
            out_specs=pl.BlockSpec((tr, lane), lambda i: (i, 0)),
        ),
        compiler_params=pltpu.CompilerParams(
            dimension_semantics=("parallel",)),
    )(g2d)

    out = y2d.reshape(-1)
    if padded:
        out = out[:n]
    return out.reshape(orig_shape).astype(orig_dtype)


# ---------------- GradientReversal module ----------------

@partial(jax.custom_vjp, nondiff_argnums=(1,))
def gradient_reversal(x, alpha=1.0):
    # Forward is identity; plain return saves a full HBM read+write.
    return x


def _grl_fwd(x, alpha):
    return x, None


def _grl_bwd(alpha, _, g):
    return (_run_neg_scale(g, alpha),)


gradient_reversal.defvjp(_grl_fwd, _grl_bwd)


class GradientReversal:
    """JAX/Pallas equivalent of the PyTorch GradientReversal module."""

    def __init__(self, alpha=1.0):
        self.alpha = float(alpha)

    def __call__(self, x):
        return gradient_reversal(x, self.alpha)


# ---------------- main ----------------

if __name__ == "__main__":
    key = jax.random.PRNGKey(0)
    x = jax.random.normal(key, (2, 4, 16, 16), dtype=jnp.float32)

    grl = GradientReversal(alpha=1.0)

    # forward: identity
    y = jax.block_until_ready(grl(x))
    assert y.shape == x.shape and y.dtype == x.dtype
    assert jnp.allclose(y, x), "forward must be identity"

    # backward: -alpha * upstream grad (runs the Pallas kernel)
    g = jax.grad(lambda v: jnp.sum(grl(v)))(x)
    g = jax.block_until_ready(g)
    assert jnp.allclose(g, -1.0 * jnp.ones_like(x)), "backward must be -alpha * grad"

    # backward with non-unit alpha and a ragged element count (pad path)
    x2 = jax.random.normal(jax.random.PRNGKey(1), (3, 5, 7), dtype=jnp.float32)
    grl2 = GradientReversal(alpha=2.5)
    g2 = jax.grad(lambda v: jnp.sum(grl2(v) * 3.0))(x2)
    g2 = jax.block_until_ready(g2)
    assert jnp.allclose(g2, -2.5 * 3.0 * jnp.ones_like(x2)), "backward must scale by -alpha"

    print("KERNEL_OK")
</pallas_src>

<mosaic_0001>
module attributes {stable_mosaic.version = 11 : i64} {
  func.func @_neg_scale_kernel(%arg0: i32, %arg1: memref<2x1024xf32, #tpu.memory_space<vmem>>, %arg2: memref<2x1024xf32, #tpu.memory_space<vmem>>) attributes {dimension_semantics = [#tpu.dimension_semantics<parallel>], iteration_bounds = array<i64: 1>, scalar_prefetch = 0 : i64, scratch_operands = 0 : i64, tpu.core_type = #tpu.core_type<tc>, window_params = [{transform_indices = @transform_0, window_bounds = array<i64: 2, 1024>}, {transform_indices = @transform_1, window_bounds = array<i64: 2, 1024>}]} {
    %c0 = arith.constant 0 : index
    %c0_0 = arith.constant 0 : index
    %0 = vector.load %arg1[%c0, %c0_0] : memref<2x1024xf32, #tpu.memory_space<vmem>>, vector<2x1024xf32>
    %cst = arith.constant -1.000000e+00 : f32
    %1 = vector.broadcast %cst : f32 to vector<2x1024xf32>
    %2 = arith.mulf %0, %1 : vector<2x1024xf32>
    %c0_1 = arith.constant 0 : index
    %c0_2 = arith.constant 0 : index
    %3 = vector.load %arg2[%c0_1, %c0_2] : memref<2x1024xf32, #tpu.memory_space<vmem>>, vector<2x1024xf32>
    tpu.vector_store %arg2[%c0_1, %c0_2], %2 {strides = array<i32>} : memref<2x1024xf32, #tpu.memory_space<vmem>>, vector<2x1024xf32>,
    return
  }
  func.func @transform_0(%arg0: i32) -> (i32, i32) {
    %c0_i32 = arith.constant 0 : i32
    %c0_i32_0 = arith.constant 0 : i32
    return %arg0, %c0_i32 : i32, i32
  }
  func.func @transform_1(%arg0: i32) -> (i32, i32) {
    %c0_i32 = arith.constant 0 : i32
    %c0_i32_0 = arith.constant 0 : i32
    return %arg0, %c0_i32 : i32, i32
  }
}

</mosaic_0001>

<llo_original>
// kernel: tpu_custom_call.1
$region0: #{tpu_custom_call.1}
  #allocation0 [shape = 'u32[]', space=smem, size = 0x4, offset = 0x4, fixed_abs, tag = 'smem constant byte address 0x4 - core index']
  #allocation1 [shape = 'u32[144,128]{1,0:T(1,128)}', space=vmem, size = 0x12000, scoped, tag = 'internal scratch']
  %s0 = inlined_call_operand.hbm [shape: f32[2,1024], index: 0, kind: input, shape index: {}]
  %s1 = inlined_call_operand.hbm [shape: f32[2,1024], index: 1, kind: output, shape index: {}]
  %s2 = sld [smem:[#allocation0]]
  $region18: #{tpu_custom_call.1} parent=0
    _
  %s4 = ssub.s32 1, %s2
  %s5 = scalar_select 0, %s4, %s2
  $region1: #{tpu_custom_call.1} parent=0
    #allocation2 [shape = 'u8[8192]{0}', space=vmem, size = 0x2000, scoped, tag = 'input window, operand 0, single buffered']
    #allocation3 [shape = 's32[1]{0}', space=sflag, size = 0x4, scoped, tag = 'scoped memory for tpu_custom_call.1']
    #allocation4 [shape = 's32[1]{0}', space=sflag, size = 0x4, scoped, tag = 'scoped memory for tpu_custom_call.1']
    #allocation5 [shape = 'u8[8192]{0}', space=vmem, size = 0x2000, scoped, tag = 'output window, operand 0, single buffered']
    %6 = vsyncpa [#allocation3], 0
    %7 = vsyncpa [#allocation4], 0
    // Predicated region
    $region2: #{tpu_custom_call.1} parent=1 // pred_check
      _
    $region3: #{tpu_custom_call.1} parent=1 // pred_check_branch
      %9 = sbr.rel (0) target = $region5
    $region4: #{tpu_custom_call.1} parent=1 // pred_region
      %s11 = ssub.s32 256, 256
      %12 = vsyncadd [#allocation3], %s11
      %s14 = sshll.u32 [#allocation2], 4
      %s15 = int_to_ptr.vmem [resolvable:$true] %s14
      %17 = dma.hbm_to_vmem [thread:$0]  %s0, 256, %s15, [#allocation3]
    $region5: #{tpu_custom_call.1} parent=1 // pred_fallthru
      _
    // Predicated region
    $region6: #{tpu_custom_call.1} parent=1 // pred_check
      _
    $region7: #{tpu_custom_call.1} parent=1 // pred_check_branch
      %19 = sbr.rel (0) target = $region9
    $region8: #{tpu_custom_call.1} parent=1 // pred_region
      %20 = dma.done [#allocation3], 256
    $region9: #{tpu_custom_call.1} parent=1 // pred_fallthru
      _
    %v21 = vld [vmem:[#allocation2] sm:$0xff]
    %v22 = vld [vmem:[#allocation2 + $0x8] sm:$0xff]
    %v23 = vmul.f32 %v21, -1.0
    %v24 = vmul.f32 %v22, -1.0
    %25 = vst [vmem:[#allocation5] sm:$0xff] %v23
    %26 = vst [vmem:[#allocation5 + $0x8] sm:$0xff] %v24
    // Predicated region
    $region10: #{tpu_custom_call.1} parent=1 // pred_check
      _
    $region11: #{tpu_custom_call.1} parent=1 // pred_check_branch
      %28 = sbr.rel (0) target = $region13
    $region12: #{tpu_custom_call.1} parent=1 // pred_region
      %s30 = ssub.s32 256, 256
      %31 = vsyncadd [#allocation4], %s30
      %s33 = sshll.u32 [#allocation5], 4
      %s34 = int_to_ptr.vmem [resolvable:$true] %s33
      %36 = dma.vmem_to_hbm [thread:$0]  %s34, 256, %s1, [#allocation4]
    $region13: #{tpu_custom_call.1} parent=1 // pred_fallthru
      _
    // Predicated region
    $region14: #{tpu_custom_call.1} parent=1 // pred_check
      _
    $region15: #{tpu_custom_call.1} parent=1 // pred_check_branch
      %38 = sbr.rel (0) target = $region17
    $region16: #{tpu_custom_call.1} parent=1 // pred_region
      %39 = dma.done [#allocation4], 256
    $region17: #{tpu_custom_call.1} parent=1 // pred_fallthru
      _
    %40 = vsyncpa [#allocation3], 1
    %41 = vsyncpa [#allocation4], 1

</llo_original>
